<compile_context>
chip_gen: v7x
topology: tpu7x:2x2x1
jax: 0.10.0
libtpu: 0.0.40
codegen_flags: <defaults>
</compile_context>

<pallas_src>
import math
from functools import partial

import jax
import jax.numpy as jnp
from jax.experimental import pallas as pl
from jax.experimental.pallas import tpu as pltpu


def _mod_attn_kernel(order_ref, x_ref, wq_ref, wk_ref, wv_ref, out_ref, *,
                     mxu_dtype):
    """One grid step == one block of `block_b` batch elements.

    order_ref : VMEM (BB, RK, 1) int32  selected row indices (ascending order,
                                        as torch.masked_select emits them)
    x_ref     : VMEM (BB, L, D)         token block
    w*_ref    : VMEM (L, D)             full weight matrices (wq pre-scaled by
                                        1/sqrt(inner_dim)); constant index map
    out_ref   : VMEM (BB, RK*D) or (BB, RK, D)
    """
    bb, l, d = x_ref.shape
    rk = order_ref.shape[1]

    x = x_ref[...]                                    # (BB, L, D)
    # Gate every token row by its matching weight row first (full-tile VPU ops,
    # scale already folded into wq), then gather the selected rows on the MXU.
    xq = x * wq_ref[...]
    xk = x * wk_ref[...]
    xv = x * wv_ref[...]

    # Whole-tile gather: onehot[b, r, l] = (order[b, r] == l).  `order` arrives
    # as (BB, RK, 1) so the broadcast compare needs no in-kernel relayout.
    # Selection by one-hot matmul is exact (a single 1.0 per row).
    iota_l = jax.lax.broadcasted_iota(jnp.int32, (bb, rk, l), 2)
    onehot = (order_ref[...] == iota_l).astype(mxu_dtype)        # (BB, RK, L)

    q = jnp.einsum("brl,bld->brd", onehot, xq.astype(mxu_dtype),
                   preferred_element_type=jnp.float32)
    k = jnp.einsum("brl,bld->brd", onehot, xk.astype(mxu_dtype),
                   preferred_element_type=jnp.float32)
    v = jnp.einsum("brl,bld->brd", onehot, xv.astype(mxu_dtype),
                   preferred_element_type=jnp.float32)

    # score contracts on D (no explicit k transpose on the VPU/XLU path).
    # TODO(synk): at real sizes check the bundle dump for an XLU vxpose on this
    # transposed-RHS contraction; if present, gather k directly as (D, RK).
    score = jnp.einsum("brd,bsd->brs", q.astype(mxu_dtype), k.astype(mxu_dtype),
                       preferred_element_type=jnp.float32)       # (BB, RK, RK)
    score = score - jnp.max(score, axis=-1, keepdims=True)
    p = jnp.exp(score)
    o = jnp.einsum("brs,bsd->brd", p.astype(mxu_dtype), v.astype(mxu_dtype),
                   preferred_element_type=jnp.float32)           # (BB, RK, D)
    # Exact softmax normalisation (plain divide): negligible cost at (RK, D)
    # per step and keeps tight parity with the reference softmax.
    o = o / jnp.sum(p, axis=-1, keepdims=True)

    # Lane-dense store: out_ref is (BB, RK*D) when D % 128 != 0 so the minor
    # dim is a multiple of 128 lanes (full vst, no vst.msk); otherwise it is
    # the natural (BB, RK, D) block and the reshape below is a no-op.
    out_ref[...] = o.reshape(out_ref.shape).astype(out_ref.dtype)


def _selected_attention(x, order, wq_scaled, wk, wv, router_k, *,
                        use_bf16_mxu=False, block_b=None):
    """Pallas attention over the gathered rows. x: (B, L, D), order: (B, RK)."""
    b, l, d = x.shape
    if block_b is None:
        # Batch several batch elements per grid step to amortise the ~0.35 us
        # per-step overhead.  block_b must be B itself or a multiple of 8 that
        # divides B so every (block_b, ...) BlockSpec keeps legal (8,128) tiling.
        # TODO(synk): on v7x with large B, pass a block_b (multiple of 8, <=B//2)
        # explicitly so >= 2 "parallel" steps land on both TensorCores.
        block_b = b if (b <= 8 or b % 8 != 0) else 8
    if not (block_b == b or (block_b % 8 == 0 and b % block_b == 0)):
        raise ValueError(f"invalid block_b={block_b} for batch={b}")

    mxu_dtype = jnp.bfloat16 if use_bf16_mxu else jnp.float32
    order3d = order.astype(jnp.int32)[..., None]              # (B, RK, 1)

    flatten_out = (d % 128) != 0
    if flatten_out:
        out_shape = jax.ShapeDtypeStruct((b, router_k * d), x.dtype)
        out_spec = pl.BlockSpec((block_b, router_k * d), lambda i: (i, 0))
    else:
        out_shape = jax.ShapeDtypeStruct((b, router_k, d), x.dtype)
        out_spec = pl.BlockSpec((block_b, router_k, d), lambda i: (i, 0, 0))

    grid_spec = pltpu.PrefetchScalarGridSpec(
        num_scalar_prefetch=0,
        grid=(b // block_b,),
        in_specs=[
            pl.BlockSpec((block_b, router_k, 1), lambda i: (i, 0, 0)),  # order
            pl.BlockSpec((block_b, l, d), lambda i: (i, 0, 0)),         # x block
            # Grid-invariant weights (constant index map -> fetched once).
            # TODO(synk): at real weight sizes on v7x (64 MiB VMEM) single-buffer
            # these (pipeline_mode=pl.Buffered(1) or pl.ANY + one manual copy).
            pl.BlockSpec((l, d), lambda i: (0, 0)),                     # wq*scale
            pl.BlockSpec((l, d), lambda i: (0, 0)),                     # wk
            pl.BlockSpec((l, d), lambda i: (0, 0)),                     # wv
        ],
        out_specs=out_spec,
    )
    out = pl.pallas_call(
        partial(_mod_attn_kernel, mxu_dtype=mxu_dtype),
        grid_spec=grid_spec,
        out_shape=out_shape,
        compiler_params=pltpu.CompilerParams(
            dimension_semantics=("parallel",),
            vmem_limit_bytes=32 * 1024 * 1024,
        ),
    )(order3d, x, wq_scaled, wk, wv)
    return out.reshape(b, router_k, d)


class Attention:
    """JAX/Pallas port of the PyTorch MoD Attention module."""

    def __init__(self, dim: int, hidden_dim: int, capacity: float, key):
        self.dim = dim
        self.capacity = capacity
        self.inner_dim = hidden_dim
        self.scale = 1.0 / math.sqrt(float(hidden_dim))
        k1, k2, k3, k4, k5 = jax.random.split(key, 5)
        bound = 1.0 / math.sqrt(dim)
        # router and to_out exist for parameter parity but (like in the
        # reference forward) are never used.
        self.router_w = jax.random.uniform(k1, (1, dim), jnp.float32, -bound, bound)
        self.router_b = jnp.zeros((1,), jnp.float32)
        self.wq = jax.random.uniform(k2, (hidden_dim, dim), jnp.float32, -bound, bound)
        self.wk = jax.random.uniform(k3, (hidden_dim, dim), jnp.float32, -bound, bound)
        self.wv = jax.random.uniform(k4, (hidden_dim, dim), jnp.float32, -bound, bound)
        bo = 1.0 / math.sqrt(hidden_dim)
        self.wo = jax.random.uniform(k5, (dim, hidden_dim), jnp.float32, -bo, bo)
        self.bo = jnp.zeros((dim,), jnp.float32)
        # Fold the softmax scale into the q weight once (zero per-call cost).
        self.wq_scaled = self.wq * self.scale

    def selected_attention(self, x, select_x_mask, router_k, *,
                           use_bf16_mxu=False, block_b=None):
        """Pallas kernel for the masked-row attention (the dead path in torch)."""
        b, l, d = x.shape
        if l != self.inner_dim or d != self.dim:
            raise ValueError(
                "masked_select on the weight matrices requires seq_len == "
                f"inner_dim and feature == dim, got L={l}, D={d}, "
                f"inner_dim={self.inner_dim}, dim={self.dim}")
        row_mask = select_x_mask[:, :, 0]                              # (B, L)
        # Debug check: the mask must select exactly router_k full rows/batch
        # (the argsort reconstruction silently mis-gathers otherwise).
        try:
            ok = bool(jnp.all(jnp.sum(row_mask.astype(jnp.int32), axis=1) == router_k))
        except jax.errors.ConcretizationTypeError:
            ok = True   # traced under jit; skip the eager check
        if not ok:
            raise ValueError("select_x_mask must select exactly router_k rows "
                             "per batch element")
        # Replicate torch.masked_select(...).view(b, router_k, d): whole rows
        # are selected and come out in ascending row order per batch.
        order = jnp.argsort(jnp.logical_not(row_mask).astype(jnp.int32), axis=1,
                            stable=True)[:, :router_k].astype(jnp.int32)
        return _selected_attention(x, order, self.wq_scaled, self.wk, self.wv,
                                   router_k, use_bf16_mxu=use_bf16_mxu,
                                   block_b=block_b)

    def __call__(self, x, select_x_mask, router_k, topk_index, *,
                 compute_dead_attention: bool = False):
        b, l, d = x.shape
        bidx = jnp.arange(b)[:, None]

        # The torch forward's final output never depends on the attention
        # result (the second row assignment overwrites it), so the whole
        # select/attention path is dead work.  Run it only when asked.
        output = jnp.zeros((b, l, d), jnp.float32)
        if compute_dead_attention:
            s_output = self.selected_attention(x, select_x_mask, router_k)
            output = output.at[bidx, topk_index].set(s_output.astype(jnp.float32))

        # Live part of the forward: output[i, topk_index[i]] = x[i, ~idx]
        # where ~idx == -idx-1 -> negative indexing -> row (L - 1 - idx).
        # TODO(synk): the per-batch dynamic row scatter has no clean tile-level
        # Pallas expression; done as JAX glue.
        output = output.at[bidx, topk_index].set(
            x[bidx, (l - 1 - topk_index)].astype(jnp.float32))
        return output


def _attention_reference(attn, x, select_x_mask, router_k):
    """Pure-JAX reference for the masked-row attention (s_output)."""
    b, l, d = x.shape
    bidx = jnp.arange(b)[:, None]
    row_mask = select_x_mask[:, :, 0]
    order = jnp.argsort(jnp.logical_not(row_mask).astype(jnp.int32), axis=1,
                        stable=True)[:, :router_k]
    sel = x[bidx, order]
    q = sel * attn.wq[order]
    k = sel * attn.wk[order]
    v = sel * attn.wv[order]
    score = jnp.einsum("bik,bjk->bij", q, k,
                       precision=jax.lax.Precision.HIGHEST) * attn.scale
    aw = jax.nn.softmax(score, axis=-1)
    return jnp.einsum("bij,bjk->bik", aw, v, precision=jax.lax.Precision.HIGHEST)


def _reference_forward(attn, x, select_x_mask, router_k, topk_index):
    """Pure-JAX reference mirroring the PyTorch forward exactly."""
    b, l, d = x.shape
    bidx = jnp.arange(b)[:, None]
    so = _attention_reference(attn, x, select_x_mask, router_k)
    out = jnp.zeros((b, l, d), jnp.float32)
    out = out.at[bidx, topk_index].set(so)
    out = out.at[bidx, topk_index].set(x[bidx, (l - 1 - topk_index)])
    return out


if __name__ == "__main__":
    key = jax.random.PRNGKey(0)
    b, l, d = 2, 16, 32
    hidden_dim = l            # forward's masked_select on weights requires L == inner_dim
    capacity = 0.5
    router_k = int(l * capacity)  # 8

    kp, kx, ki = jax.random.split(key, 3)
    attn = Attention(dim=d, hidden_dim=hidden_dim, capacity=capacity, key=kp)
    x = jax.random.normal(kx, (b, l, d), dtype=jnp.float32)

    # per-batch distinct top-k indices (as torch.topk would produce)
    topk_index = jnp.stack(
        [jax.random.permutation(jax.random.fold_in(ki, i), l)[:router_k]
         for i in range(b)]).astype(jnp.int32)                           # (B, RK)

    # boolean mask selecting exactly those RK full rows per batch
    row_mask = jnp.zeros((b, l), dtype=bool)
    row_mask = row_mask.at[jnp.arange(b)[:, None], topk_index].set(True)
    select_x_mask = jnp.broadcast_to(row_mask[:, :, None], (b, l, d))

    # Fast (default) path: dead attention skipped entirely.
    out_fast = jax.block_until_ready(attn(x, select_x_mask, router_k, topk_index))
    # Faithful path: runs the Pallas attention kernel (result overwritten, as in torch).
    out_full = jax.block_until_ready(
        attn(x, select_x_mask, router_k, topk_index, compute_dead_attention=True))
    # Validate the Pallas attention kernel itself against pure-JAX math,
    # in both f32-MXU and bf16-MXU (v6e/v7x) operand modes.
    s_out = jax.block_until_ready(attn.selected_attention(x, select_x_mask, router_k))
    s_out_bf16 = jax.block_until_ready(
        attn.selected_attention(x, select_x_mask, router_k, use_bf16_mxu=True))
    s_ref = _attention_reference(attn, x, select_x_mask, router_k)

    ref = _reference_forward(attn, x, select_x_mask, router_k, topk_index)

    assert out_fast.shape == (b, l, d) and out_fast.dtype == jnp.float32
    assert jnp.allclose(out_fast, ref, atol=1e-6, rtol=1e-6), "fast path mismatch"
    assert jnp.allclose(out_full, ref, atol=1e-6, rtol=1e-6), "faithful path mismatch"
    # exact normalisation -> tight tolerance (margin covers MXU pass-precision
    # differences vs. the HIGHEST-precision XLA reference)
    assert jnp.allclose(s_out, s_ref, atol=2e-3, rtol=2e-3), "attention kernel mismatch"
    # bf16 MXU operands (f32 accumulate) -> relaxed tolerance
    assert jnp.allclose(s_out_bf16, s_ref, atol=5e-2, rtol=5e-2), "bf16 kernel mismatch"

    print("KERNEL_OK")
</pallas_src>

<mosaic_0001>
module attributes {stable_mosaic.version = 11 : i64} {
  func.func @_mod_attn_kernel(%arg0: i32, %arg1: memref<2x8x1xi32, #tpu.memory_space<vmem>>, %arg2: memref<2x16x32xf32, #tpu.memory_space<vmem>>, %arg3: memref<16x32xf32, #tpu.memory_space<vmem>>, %arg4: memref<16x32xf32, #tpu.memory_space<vmem>>, %arg5: memref<16x32xf32, #tpu.memory_space<vmem>>, %arg6: memref<2x256xf32, #tpu.memory_space<vmem>>) attributes {dimension_semantics = [#tpu.dimension_semantics<parallel>], iteration_bounds = array<i64: 1>, scalar_prefetch = 0 : i64, scratch_operands = 0 : i64, tpu.core_type = #tpu.core_type<tc>, window_params = [{transform_indices = @transform_0, window_bounds = array<i64: 2, 8, 1>}, {transform_indices = @transform_1, window_bounds = array<i64: 2, 16, 32>}, {pipeline_mode = #tpu.pipeline_mode<synchronous>, transform_indices = @transform_2, window_bounds = array<i64: 16, 32>}, {pipeline_mode = #tpu.pipeline_mode<synchronous>, transform_indices = @transform_3, window_bounds = array<i64: 16, 32>}, {pipeline_mode = #tpu.pipeline_mode<synchronous>, transform_indices = @transform_4, window_bounds = array<i64: 16, 32>}, {transform_indices = @transform_5, window_bounds = array<i64: 2, 256>}]} {
    %c0 = arith.constant 0 : index
    %c0_0 = arith.constant 0 : index
    %c0_1 = arith.constant 0 : index
    %0 = vector.load %arg2[%c0, %c0_0, %c0_1] : memref<2x16x32xf32, #tpu.memory_space<vmem>>, vector<2x16x32xf32>
    %c0_2 = arith.constant 0 : index
    %c0_3 = arith.constant 0 : index
    %1 = vector.load %arg3[%c0_2, %c0_3] : memref<16x32xf32, #tpu.memory_space<vmem>>, vector<16x32xf32>
    %2 = vector.shape_cast %1 : vector<16x32xf32> to vector<1x16x32xf32>
    %3 = vector.broadcast %2 : vector<1x16x32xf32> to vector<2x16x32xf32>
    %4 = arith.mulf %0, %3 : vector<2x16x32xf32>
    %c0_4 = arith.constant 0 : index
    %c0_5 = arith.constant 0 : index
    %5 = vector.load %arg4[%c0_4, %c0_5] : memref<16x32xf32, #tpu.memory_space<vmem>>, vector<16x32xf32>
    %6 = vector.shape_cast %5 : vector<16x32xf32> to vector<1x16x32xf32>
    %7 = vector.broadcast %6 : vector<1x16x32xf32> to vector<2x16x32xf32>
    %8 = arith.mulf %0, %7 : vector<2x16x32xf32>
    %c0_6 = arith.constant 0 : index
    %c0_7 = arith.constant 0 : index
    %9 = vector.load %arg5[%c0_6, %c0_7] : memref<16x32xf32, #tpu.memory_space<vmem>>, vector<16x32xf32>
    %10 = vector.shape_cast %9 : vector<16x32xf32> to vector<1x16x32xf32>
    %11 = vector.broadcast %10 : vector<1x16x32xf32> to vector<2x16x32xf32>
    %12 = arith.mulf %0, %11 : vector<2x16x32xf32>
    %13 = tpu.iota {dimensions = array<i32: 2>} : vector<2x8x16xi32>
    %c0_8 = arith.constant 0 : index
    %c0_9 = arith.constant 0 : index
    %c0_10 = arith.constant 0 : index
    %14 = vector.load %arg1[%c0_8, %c0_9, %c0_10] : memref<2x8x1xi32, #tpu.memory_space<vmem>>, vector<2x8x1xi32>
    %15 = vector.broadcast %14 : vector<2x8x1xi32> to vector<2x8x16xi32>
    %16 = arith.cmpi eq, %15, %13 : vector<2x8x16xi32>
    %17 = arith.extui %16 : vector<2x8x16xi1> to vector<2x8x16xi32>
    %18 = arith.sitofp %17 : vector<2x8x16xi32> to vector<2x8x16xf32>
    "tpu.trace_start"() <{level = 10 : i32, message = "brl,bld->brd"}> : () -> ()
    %cst = arith.constant dense<0.000000e+00> : vector<2x8x32xf32>
    %19 = tpu.matmul %18, %4, %cst {dimension_numbers = #tpu.dot_dimension_numbers<[2], [1], [1], [2], [0, 0, 0, 1, 1, 2], [0], [0]>} : vector<2x8x16xf32>, vector<2x16x32xf32>, vector<2x8x32xf32> -> vector<2x8x32xf32>
    %cst_11 = arith.constant dense<0.000000e+00> : vector<2x8x32xf32>
    %20 = tpu.matmul %18, %8, %cst_11 {dimension_numbers = #tpu.dot_dimension_numbers<[2], [1], [1], [2], [0, 0, 0, 1, 1, 2], [0], [0]>} : vector<2x8x16xf32>, vector<2x16x32xf32>, vector<2x8x32xf32> -> vector<2x8x32xf32>
    %cst_12 = arith.constant dense<0.000000e+00> : vector<2x8x32xf32>
    %21 = tpu.matmul %18, %12, %cst_12 {dimension_numbers = #tpu.dot_dimension_numbers<[2], [1], [1], [2], [0, 0, 0, 1, 1, 2], [0], [0]>} : vector<2x8x16xf32>, vector<2x16x32xf32>, vector<2x8x32xf32> -> vector<2x8x32xf32>
    "tpu.trace_stop"() : () -> ()
    "tpu.trace_start"() <{level = 10 : i32, message = "brd,bsd->brs"}> : () -> ()
    %cst_13 = arith.constant dense<0.000000e+00> : vector<2x8x8xf32>
    %22 = tpu.matmul %19, %20, %cst_13 {dimension_numbers = #tpu.dot_dimension_numbers<[2], [2], [1], [1], [0, 0, 0, 1, 1, 1], [0], [0]>} : vector<2x8x32xf32>, vector<2x8x32xf32>, vector<2x8x8xf32> -> vector<2x8x8xf32>
    "tpu.trace_stop"() : () -> ()
    %cst_14 = arith.constant dense<0xFF800000> : vector<2x8xf32>
    %23 = vector.multi_reduction <maximumf>, %22, %cst_14 [2] : vector<2x8x8xf32> to vector<2x8xf32>
    %24 = vector.shape_cast %23 : vector<2x8xf32> to vector<2x8x1xf32>
    %25 = vector.broadcast %24 : vector<2x8x1xf32> to vector<2x8x8xf32>
    %26 = arith.subf %22, %25 : vector<2x8x8xf32>
    %27 = math.exp %26 : vector<2x8x8xf32>
    "tpu.trace_start"() <{level = 10 : i32, message = "brs,bsd->brd"}> : () -> ()
    %cst_15 = arith.constant dense<0.000000e+00> : vector<2x8x32xf32>
    %28 = tpu.matmul %27, %21, %cst_15 {dimension_numbers = #tpu.dot_dimension_numbers<[2], [1], [1], [2], [0, 0, 0, 1, 1, 2], [0], [0]>} : vector<2x8x8xf32>, vector<2x8x32xf32>, vector<2x8x32xf32> -> vector<2x8x32xf32>
    "tpu.trace_stop"() : () -> ()
    %cst_16 = arith.constant dense<0.000000e+00> : vector<2x8xf32>
    %29 = vector.multi_reduction <add>, %27, %cst_16 [2] : vector<2x8x8xf32> to vector<2x8xf32>
    %30 = vector.shape_cast %29 : vector<2x8xf32> to vector<2x8x1xf32>
    %31 = vector.broadcast %30 : vector<2x8x1xf32> to vector<2x8x32xf32>
    %32 = arith.divf %28, %31 : vector<2x8x32xf32>
    %33 = vector.shape_cast %32 : vector<2x8x32xf32> to vector<2x256xf32>
    %c0_17 = arith.constant 0 : index
    %c0_18 = arith.constant 0 : index
    %34 = vector.load %arg6[%c0_17, %c0_18] : memref<2x256xf32, #tpu.memory_space<vmem>>, vector<2x256xf32>
    tpu.vector_store %arg6[%c0_17, %c0_18], %33 {strides = array<i32>} : memref<2x256xf32, #tpu.memory_space<vmem>>, vector<2x256xf32>,
    return
  }
  func.func @transform_0(%arg0: i32) -> (i32, i32, i32) {
    %c0_i32 = arith.constant 0 : i32
    %c0_i32_0 = arith.constant 0 : i32
    %c0_i32_1 = arith.constant 0 : i32
    return %arg0, %c0_i32, %c0_i32_0 : i32, i32, i32
  }
  func.func @transform_1(%arg0: i32) -> (i32, i32, i32) {
    %c0_i32 = arith.constant 0 : i32
    %c0_i32_0 = arith.constant 0 : i32
    %c0_i32_1 = arith.constant 0 : i32
    return %arg0, %c0_i32, %c0_i32_0 : i32, i32, i32
  }
  func.func @transform_2(%arg0: i32) -> (i32, i32) {
    %c0_i32 = arith.constant 0 : i32
    %c0_i32_0 = arith.constant 0 : i32
    %c0_i32_1 = arith.constant 0 : i32
    return %c0_i32, %c0_i32_0 : i32, i32
  }
  func.func @transform_3(%arg0: i32) -> (i32, i32) {
    %c0_i32 = arith.constant 0 : i32
    %c0_i32_0 = arith.constant 0 : i32
    %c0_i32_1 = arith.constant 0 : i32
    return %c0_i32, %c0_i32_0 : i32, i32
  }
  func.func @transform_4(%arg0: i32) -> (i32, i32) {
    %c0_i32 = arith.constant 0 : i32
    %c0_i32_0 = arith.constant 0 : i32
    %c0_i32_1 = arith.constant 0 : i32
    return %c0_i32, %c0_i32_0 : i32, i32
  }
  func.func @transform_5(%arg0: i32) -> (i32, i32) {
    %c0_i32 = arith.constant 0 : i32
    %c0_i32_0 = arith.constant 0 : i32
    return %arg0, %c0_i32 : i32, i32
  }
}

</mosaic_0001>

<llo_original>
// kernel: tpu_custom_call.1
$region0: #{tpu_custom_call.1}
  #allocation0 [shape = 'u32[]', space=smem, size = 0x4, offset = 0x4, fixed_abs, tag = 'smem constant byte address 0x4 - core index']
  #allocation1 [shape = 'u32[144,128]{1,0:T(1,128)}', space=vmem, size = 0x12000, scoped, tag = 'internal scratch']
  %s0 = inlined_call_operand.vmem [shape: s32[2,8,1], index: 0, kind: input, shape index: {}]
  %s1 = inlined_call_operand.hbm [shape: f32[2,16,32], index: 1, kind: input, shape index: {}]
  %s2 = inlined_call_operand.vmem [shape: f32[16,32], index: 2, kind: input, shape index: {}]
  %s3 = inlined_call_operand.hbm [shape: f32[16,32], index: 3, kind: input, shape index: {}]
  %s4 = inlined_call_operand.vmem [shape: f32[16,32], index: 4, kind: input, shape index: {}]
  %s5 = inlined_call_operand.hbm [shape: f32[2,256], index: 5, kind: output, shape index: {}]
  %s6 = sld [smem:[#allocation0]]
  $region38: #{tpu_custom_call.1} parent=0
    _
  %s8 = ssub.s32 1, %s6
  %s9 = scalar_select 0, %s8, %s6
  $region1: #{tpu_custom_call.1} parent=0
    #allocation2 [shape = 'u8[16384]{0}', space=vmem, size = 0x4000, scoped, tag = 'input window, operand 1, single buffered']
    #allocation3 [shape = 's32[1]{0}', space=sflag, size = 0x4, scoped, tag = 'scoped memory for tpu_custom_call.1']
    #allocation4 [shape = 's32[1]{0}', space=sflag, size = 0x4, scoped, tag = 'scoped memory for tpu_custom_call.1']
    #allocation5 [shape = 'u8[8192]{0}', space=vmem, size = 0x2000, scoped, tag = 'input window, operand 3, single buffered']
    #allocation6 [shape = 's32[1]{0}', space=sflag, size = 0x4, scoped, tag = 'scoped memory for tpu_custom_call.1']
    #allocation7 [shape = 'u8[2048]{0}', space=vmem, size = 0x800, scoped, tag = 'output window, operand 0, single buffered']
    %10 = vsyncpa [#allocation3], 0
    %11 = vsyncpa [#allocation6], 0
    %12 = vsyncpa [#allocation4], 0
    // Predicated region
    $region2: #{tpu_custom_call.1} parent=1 // pred_check
      _
    $region3: #{tpu_custom_call.1} parent=1 // pred_check_branch
      %14 = sbr.rel (0) target = $region5
    $region4: #{tpu_custom_call.1} parent=1 // pred_region
      _
    $region5: #{tpu_custom_call.1} parent=1 // pred_fallthru
      _
    // Predicated region
    $region6: #{tpu_custom_call.1} parent=1 // pred_check
      _
    $region7: #{tpu_custom_call.1} parent=1 // pred_check_branch
      %16 = sbr.rel (0) target = $region9
    $region8: #{tpu_custom_call.1} parent=1 // pred_region
      %s18 = ssub.s32 512, 512
      %19 = vsyncadd [#allocation3], %s18
      %s20 = sshll.u32 [#allocation2], 4
      %s21 = int_to_ptr.vmem [resolvable:$true] %s20
      %26 = dma.hbm_to_vmem [thread:$0]  %s1, 512, %s21, [#allocation3], 128, 128, 8
    $region9: #{tpu_custom_call.1} parent=1 // pred_fallthru
      _
    // Predicated region
    $region10: #{tpu_custom_call.1} parent=1 // pred_check
      _
    $region11: #{tpu_custom_call.1} parent=1 // pred_check_branch
      %28 = sbr.rel (0) target = $region13
    $region12: #{tpu_custom_call.1} parent=1 // pred_region
      _
    $region13: #{tpu_custom_call.1} parent=1 // pred_fallthru
      _
    // Predicated region
    $region14: #{tpu_custom_call.1} parent=1 // pred_check
      _
    $region15: #{tpu_custom_call.1} parent=1 // pred_check_branch
      %30 = sbr.rel (0) target = $region17
    $region16: #{tpu_custom_call.1} parent=1 // pred_region
      %s32 = ssub.s32 256, 256
      %33 = vsyncadd [#allocation6], %s32
      %s34 = sshll.u32 [#allocation5], 4
      %s35 = int_to_ptr.vmem [resolvable:$true] %s34
      %40 = dma.hbm_to_vmem [thread:$0]  %s3, 256, %s35, [#allocation6], 128, 128, 8
    $region17: #{tpu_custom_call.1} parent=1 // pred_fallthru
      _
    // Predicated region
    $region18: #{tpu_custom_call.1} parent=1 // pred_check
      _
    $region19: #{tpu_custom_call.1} parent=1 // pred_check_branch
      %42 = sbr.rel (0) target = $region21
    $region20: #{tpu_custom_call.1} parent=1 // pred_region
      _
    $region21: #{tpu_custom_call.1} parent=1 // pred_fallthru
      _
    // Predicated region
    $region22: #{tpu_custom_call.1} parent=1 // pred_check
      _
    $region23: #{tpu_custom_call.1} parent=1 // pred_check_branch
      %44 = sbr.rel (0) target = $region25
    $region24: #{tpu_custom_call.1} parent=1 // pred_region
      %45 = dma.done [#allocation3], 512
    $region25: #{tpu_custom_call.1} parent=1 // pred_fallthru
      _
    // Predicated region
    $region26: #{tpu_custom_call.1} parent=1 // pred_check
      _
    $region27: #{tpu_custom_call.1} parent=1 // pred_check_branch
      %47 = sbr.rel (0) target = $region29
    $region28: #{tpu_custom_call.1} parent=1 // pred_region
      %48 = dma.done [#allocation6], 256
    $region29: #{tpu_custom_call.1} parent=1 // pred_fallthru
      _
    %v49 = vld [vmem:[#allocation2] sm:$0xff]
    %v50 = vld [vmem:[#allocation2 + $0x8] sm:$0xff]
    %v51 = vld [vmem:[#allocation2 + $0x10] sm:$0xff]
    %v52 = vld [vmem:[#allocation2 + $0x18] sm:$0xff]
    %v53 = vld [vmem:[%s2] sm:$0xff]
    %v54 = vld [vmem:[%s2 + $0x8] sm:$0xff]
    %v55 = vmul.f32 %v49, %v53
    %v56 = vmul.f32 %v50, %v54
    %v57 = vmul.f32 %v51, %v53
    %v58 = vmul.f32 %v52, %v54
    %v59 = vld [vmem:[#allocation5] sm:$0xff]
    %v60 = vld [vmem:[#allocation5 + $0x8] sm:$0xff]
    %v61 = vmul.f32 %v49, %v59
    %v62 = vmul.f32 %v50, %v60
    %v63 = vmul.f32 %v51, %v59
    %v64 = vmul.f32 %v52, %v60
    %v65 = vld [vmem:[%s4] sm:$0xff]
    %v66 = vld [vmem:[%s4 + $0x8] sm:$0xff]
    %v67 = vmul.f32 %v49, %v65
    %v68 = vmul.f32 %v50, %v66
    %v69 = vmul.f32 %v51, %v65
    %v70 = vmul.f32 %v52, %v66
    %v71 = vlaneseq
    %v72 = vand.u32 %v71, 127
    %v73 = vld [vmem:[%s0] sm:$0xff]
    %v74 = vld [vmem:[%s0 + $0x8] sm:$0xff]
    %75 = vset.pattern.permute.xlu0 0
    %76 = vperm.xlu0 %75, %v73
    %v77 = vpop.permute.xlu0 %76
    %78 = vset.pattern.permute.xlu0 0
    %79 = vperm.xlu0 %78, %v74
    %v80 = vpop.permute.xlu0 %79
    %vm81 = vcmp.eq.s32.totalorder %v77, %v72
    %vm82 = vcmp.eq.s32.totalorder %v80, %v72
    %v83 = vsel %vm81, 1, 0
    %v84 = vsel %vm82, 1, 0
    %v85 = vcvt.s32.f32 %v83
    %v86 = vcvt.s32.f32 %v84
    %vm87 = vcmask 130048
    %v89 = vsel %vm87, %v85, 0
    %91 = vmatprep.subr.mxu0 0.0
    %92 = vmatpush1.msra.mxu0 %v55
    %93 = vmatprep.subr.mxu0 0.0
    %94 = vmatpush1.msra.mxu0 %v56
    %95 = vmatprep.subr.mxu0 0.0
    %96 = vmatpush1.msra.mxu0 0.0
    %97 = vmatprep.subr.mxu0 0.0
    %98 = vmatpush1.msra.mxu0 0.0
    %99 = vmatprep.subr.mxu0 0.0
    %100 = vmatpush1.msra.mxu0 0.0
    %101 = vmatprep.subr.mxu0 0.0
    %102 = vmatpush1.msra.mxu0 0.0
    %103 = vmatprep.subr.mxu0 0.0
    %104 = vmatpush1.msra.mxu0 0.0
    %105 = vmatprep.subr.mxu0 0.0
    %106 = vmatpush1.msra.mxu0 0.0
    %107 = vmatprep.subr.mxu0 0.0
    %108 = vmatpush1.msra.mxu0 0.0
    %109 = vmatprep.subr.mxu0 0.0
    %110 = vmatpush1.msra.mxu0 0.0
    %111 = vmatprep.subr.mxu0 0.0
    %112 = vmatpush1.msra.mxu0 0.0
    %113 = vmatprep.subr.mxu0 0.0
    %114 = vmatpush1.msra.mxu0 0.0
    %115 = vmatprep.subr.mxu0 0.0
    %116 = vmatpush1.msra.mxu0 0.0
    %117 = vmatprep.subr.mxu0 0.0
    %118 = vmatpush1.msra.mxu0 0.0
    %119 = vmatprep.subr.mxu0 0.0
    %120 = vmatpush1.msra.mxu0 0.0
    %121 = vmatprep.subr.mxu0 0.0
    %122 = vmatpush1.msra.mxu0 0.0
    %123 = vmatprep.subr.mxu0 0.0
    %124 = vmatpush1.msra.mxu0 0.0
    %125 = vmatprep.subr.mxu0 0.0
    %126 = vmatpush1.msra.mxu0 0.0
    %127 = vmatprep.subr.mxu0 0.0
    %128 = vmatpush1.msra.mxu0 0.0
    %129 = vmatprep.subr.mxu0 0.0
    %130 = vmatpush1.msra.mxu0 0.0
    %131 = vmatprep.subr.mxu0 0.0
    %132 = vmatpush1.msra.mxu0 0.0
    %133 = vmatprep.subr.mxu0 0.0
    %134 = vmatpush1.msra.mxu0 0.0
    %135 = vmatprep.subr.mxu0 0.0
    %136 = vmatpush1.msra.mxu0 0.0
    %137 = vmatprep.subr.mxu0 0.0
    %138 = vmatpush1.msra.mxu0 0.0
    %139 = vmatprep.subr.mxu0 0.0
    %140 = vmatpush1.msra.mxu0 0.0
    %141 = vmatprep.subr.mxu0 0.0
    %142 = vmatpush1.msra.mxu0 0.0
    %143 = vmatprep.subr.mxu0 0.0
    %144 = vmatpush1.msra.mxu0 0.0
    %145 = vmatprep.subr.mxu0 0.0
    %146 = vmatpush1.msra.mxu0 0.0
    %147 = vmatprep.subr.mxu0 0.0
    %148 = vmatpush1.msra.mxu0 0.0
    %149 = vmatprep.subr.mxu0 0.0
    %150 = vmatpush1.msra.mxu0 0.0
    %151 = vmatprep.subr.mxu0 0.0
    %152 = vmatpush1.msra.mxu0 0.0
    %153 = vmatprep.subr.mxu0 0.0
    %154 = vmatpush1.msra.mxu0 0.0
    %155 = vmatprep.mubr.f32.mxu0 0.0
    %156 = vmatmul.mubr.f32.gmra.mrb[0].mxu0 %v89
    %v157 = vpop.f32.mrb[0].mxu0
    %v158 = vadd.f32 0.0, %v157
    %v159 = vpop.f32.mrb[0].mxu0
    %160 = vdwg.mxu0
    %v162 = vsel %vm87, %v86, 0
    %164 = vmatprep.subr.mxu0 0.0
    %165 = vmatpush1.msra.mxu0 %v57
    %166 = vmatprep.subr.mxu0 0.0
    %167 = vmatpush1.msra.mxu0 %v58
    %168 = vmatprep.subr.mxu0 0.0
    %169 = vmatpush1.msra.mxu0 0.0
    %170 = vmatprep.subr.mxu0 0.0
    %171 = vmatpush1.msra.mxu0 0.0
    %172 = vmatprep.subr.mxu0 0.0
    %173 = vmatpush1.msra.mxu0 0.0
    %174 = vmatprep.subr.mxu0 0.0
    %175 = vmatpush1.msra.mxu0 0.0
    %176 = vmatprep.subr.mxu0 0.0
    %177 = vmatpush1.msra.mxu0 0.0
    %178 = vmatprep.subr.mxu0 0.0
    %179 = vmatpush1.msra.mxu0 0.0
    %180 = vmatprep.subr.mxu0 0.0
    %181 = vmatpush1.msra.mxu0 0.0
    %182 = vmatprep.subr.mxu0 0.0
    %183 = vmatpush1.msra.mxu0 0.0
    %184 = vmatprep.subr.mxu0 0.0
    %185 = vmatpush1.msra.mxu0 0.0
    %186 = vmatprep.subr.mxu0 0.0
    %187 = vmatpush1.msra.mxu0 0.0
    %188 = vmatprep.subr.mxu0 0.0
    %189 = vmatpush1.msra.mxu0 0.0
    %190 = vmatprep.subr.mxu0 0.0
    %191 = vmatpush1.msra.mxu0 0.0
    %192 = vmatprep.subr.mxu0 0.0
    %193 = vmatpush1.msra.mxu0 0.0
    %194 = vmatprep.subr.mxu0 0.0
    %195 = vmatpush1.msra.mxu0 0.0
    %196 = vmatprep.subr.mxu0 0.0
    %197 = vmatpush1.msra.mxu0 0.0
    %198 = vmatprep.subr.mxu0 0.0
    %199 = vmatpush1.msra.mxu0 0.0
    %200 = vmatprep.subr.mxu0 0.0
    %201 = vmatpush1.msra.mxu0 0.0
    %202 = vmatprep.subr.mxu0 0.0
    %203 = vmatpush1.msra.mxu0 0.0
    %204 = vmatprep.subr.mxu0 0.0
    %205 = vmatpush1.msra.mxu0 0.0
    %206 = vmatprep.subr.mxu0 0.0
    %207 = vmatpush1.msra.mxu0 0.0
    %208 = vmatprep.subr.mxu0 0.0
    %209 = vmatpush1.msra.mxu0 0.0
    %210 = vmatprep.subr.mxu0 0.0
    %211 = vmatpush1.msra.mxu0 0.0
    %212 = vmatprep.subr.mxu0 0.0
    %213 = vmatpush1.msra.mxu0 0.0
    %214 = vmatprep.subr.mxu0 0.0
    %215 = vmatpush1.msra.mxu0 0.0
    %216 = vmatprep.subr.mxu0 0.0
    %217 = vmatpush1.msra.mxu0 0.0
    %218 = vmatprep.subr.mxu0 0.0
    %219 = vmatpush1.msra.mxu0 0.0
    %220 = vmatprep.subr.mxu0 0.0
    %221 = vmatpush1.msra.mxu0 0.0
    %222 = vmatprep.subr.mxu0 0.0
    %223 = vmatpush1.msra.mxu0 0.0
    %224 = vmatprep.subr.mxu0 0.0
    %225 = vmatpush1.msra.mxu0 0.0
    %226 = vmatprep.subr.mxu0 0.0
    %227 = vmatpush1.msra.mxu0 0.0
    %228 = vmatprep.mubr.f32.mxu0 0.0
    %229 = vmatmul.mubr.f32.gmra.mrb[0].mxu0 %v162
    %v230 = vpop.f32.mrb[0].mxu0
    %v231 = vadd.f32 0.0, %v230
    %v232 = vpop.f32.mrb[0].mxu0
    %233 = vdwg.mxu0
    %234 = vmatprep.subr.mxu0 0.0
    %235 = vmatpush1.msra.mxu0 %v61
    %236 = vmatprep.subr.mxu0 0.0
    %237 = vmatpush1.msra.mxu0 %v62
    %238 = vmatprep.subr.mxu0 0.0
    %239 = vmatpush1.msra.mxu0 0.0
    %240 = vmatprep.subr.mxu0 0.0
    %241 = vmatpush1.msra.mxu0 0.0
    %242 = vmatprep.subr.mxu0 0.0
    %243 = vmatpush1.msra.mxu0 0.0
    %244 = vmatprep.subr.mxu0 0.0
    %245 = vmatpush1.msra.mxu0 0.0
    %246 = vmatprep.subr.mxu0 0.0
    %247 = vmatpush1.msra.mxu0 0.0
    %248 = vmatprep.subr.mxu0 0.0
    %249 = vmatpush1.msra.mxu0 0.0
    %250 = vmatprep.subr.mxu0 0.0
    %251 = vmatpush1.msra.mxu0 0.0
    %252 = vmatprep.subr.mxu0 0.0
    %253 = vmatpush1.msra.mxu0 0.0
    %254 = vmatprep.subr.mxu0 0.0
    %255 = vmatpush1.msra.mxu0 0.0
    %256 = vmatprep.subr.mxu0 0.0
    %257 = vmatpush1.msra.mxu0 0.0
    %258 = vmatprep.subr.mxu0 0.0
    %259 = vmatpush1.msra.mxu0 0.0
    %260 = vmatprep.subr.mxu0 0.0
    %261 = vmatpush1.msra.mxu0 0.0
    %262 = vmatprep.subr.mxu0 0.0
    %263 = vmatpush1.msra.mxu0 0.0
    %264 = vmatprep.subr.mxu0 0.0
    %265 = vmatpush1.msra.mxu0 0.0
    %266 = vmatprep.subr.mxu0 0.0
    %267 = vmatpush1.msra.mxu0 0.0
    %268 = vmatprep.subr.mxu0 0.0
    %269 = vmatpush1.msra.mxu0 0.0
    %270 = vmatprep.subr.mxu0 0.0
    %271 = vmatpush1.msra.mxu0 0.0
    %272 = vmatprep.subr.mxu0 0.0
    %273 = vmatpush1.msra.mxu0 0.0
    %274 = vmatprep.subr.mxu0 0.0
    %275 = vmatpush1.msra.mxu0 0.0
    %276 = vmatprep.subr.mxu0 0.0
    %277 = vmatpush1.msra.mxu0 0.0
    %278 = vmatprep.subr.mxu0 0.0
    %279 = vmatpush1.msra.mxu0 0.0
    %280 = vmatprep.subr.mxu0 0.0
    %281 = vmatpush1.msra.mxu0 0.0
    %282 = vmatprep.subr.mxu0 0.0
    %283 = vmatpush1.msra.mxu0 0.0
    %284 = vmatprep.subr.mxu0 0.0
    %285 = vmatpush1.msra.mxu0 0.0
    %286 = vmatprep.subr.mxu0 0.0
    %287 = vmatpush1.msra.mxu0 0.0
    %288 = vmatprep.subr.mxu0 0.0
    %289 = vmatpush1.msra.mxu0 0.0
    %290 = vmatprep.subr.mxu0 0.0
    %291 = vmatpush1.msra.mxu0 0.0
    %292 = vmatprep.subr.mxu0 0.0
    %293 = vmatpush1.msra.mxu0 0.0
    %294 = vmatprep.subr.mxu0 0.0
    %295 = vmatpush1.msra.mxu0 0.0
    %296 = vmatprep.subr.mxu0 0.0
    %297 = vmatpush1.msra.mxu0 0.0
    %298 = vmatprep.mubr.f32.mxu0 0.0
    %299 = vmatmul.mubr.f32.gmra.mrb[0].mxu0 %v89
    %v300 = vpop.f32.mrb[0].mxu0
    %v301 = vadd.f32 0.0, %v300
    %v302 = vpop.f32.mrb[0].mxu0
    %303 = vdwg.mxu0
    %304 = vmatprep.subr.mxu0 0.0
    %305 = vmatpush1.msra.mxu0 %v63
    %306 = vmatprep.subr.mxu0 0.0
    %307 = vmatpush1.msra.mxu0 %v64
    %308 = vmatprep.subr.mxu0 0.0
    %309 = vmatpush1.msra.mxu0 0.0
    %310 = vmatprep.subr.mxu0 0.0
    %311 = vmatpush1.msra.mxu0 0.0
    %312 = vmatprep.subr.mxu0 0.0
    %313 = vmatpush1.msra.mxu0 0.0
    %314 = vmatprep.subr.mxu0 0.0
    %315 = vmatpush1.msra.mxu0 0.0
    %316 = vmatprep.subr.mxu0 0.0
    %317 = vmatpush1.msra.mxu0 0.0
    %318 = vmatprep.subr.mxu0 0.0
    %319 = vmatpush1.msra.mxu0 0.0
    %320 = vmatprep.subr.mxu0 0.0
    %321 = vmatpush1.msra.mxu0 0.0
    %322 = vmatprep.subr.mxu0 0.0
    %323 = vmatpush1.msra.mxu0 0.0
    %324 = vmatprep.subr.mxu0 0.0
    %325 = vmatpush1.msra.mxu0 0.0
    %326 = vmatprep.subr.mxu0 0.0
    %327 = vmatpush1.msra.mxu0 0.0
    %328 = vmatprep.subr.mxu0 0.0
    %329 = vmatpush1.msra.mxu0 0.0
    %330 = vmatprep.subr.mxu0 0.0
    %331 = vmatpush1.msra.mxu0 0.0
    %332 = vmatprep.subr.mxu0 0.0
    %333 = vmatpush1.msra.mxu0 0.0
    %334 = vmatprep.subr.mxu0 0.0
    %335 = vmatpush1.msra.mxu0 0.0
    %336 = vmatprep.subr.mxu0 0.0
    %337 = vmatpush1.msra.mxu0 0.0
    %338 = vmatprep.subr.mxu0 0.0
    %339 = vmatpush1.msra.mxu0 0.0
    %340 = vmatprep.subr.mxu0 0.0
    %341 = vmatpush1.msra.mxu0 0.0
    %342 = vmatprep.subr.mxu0 0.0
    %343 = vmatpush1.msra.mxu0 0.0
    %344 = vmatprep.subr.mxu0 0.0
    %345 = vmatpush1.msra.mxu0 0.0
    %346 = vmatprep.subr.mxu0 0.0
    %347 = vmatpush1.msra.mxu0 0.0
    %348 = vmatprep.subr.mxu0 0.0
    %349 = vmatpush1.msra.mxu0 0.0
    %350 = vmatprep.subr.mxu0 0.0
    %351 = vmatpush1.msra.mxu0 0.0
    %352 = vmatprep.subr.mxu0 0.0
    %353 = vmatpush1.msra.mxu0 0.0
    %354 = vmatprep.subr.mxu0 0.0
    %355 = vmatpush1.msra.mxu0 0.0
    %356 = vmatprep.subr.mxu0 0.0
    %357 = vmatpush1.msra.mxu0 0.0
    %358 = vmatprep.subr.mxu0 0.0
    %359 = vmatpush1.msra.mxu0 0.0
    %360 = vmatprep.subr.mxu0 0.0
    %361 = vmatpush1.msra.mxu0 0.0
    %362 = vmatprep.subr.mxu0 0.0
    %363 = vmatpush1.msra.mxu0 0.0
    %364 = vmatprep.subr.mxu0 0.0
    %365 = vmatpush1.msra.mxu0 0.0
    %366 = vmatprep.subr.mxu0 0.0
    %367 = vmatpush1.msra.mxu0 0.0
    %368 = vmatprep.mubr.f32.mxu0 0.0
    %369 = vmatmul.mubr.f32.gmra.mrb[0].mxu0 %v162
    %v370 = vpop.f32.mrb[0].mxu0
    %v371 = vadd.f32 0.0, %v370
    %v372 = vpop.f32.mrb[0].mxu0
    %373 = vdwg.mxu0
    %374 = vmatprep.subr.mxu0 0.0
    %375 = vmatpush1.msra.mxu0 %v67
    %376 = vmatprep.subr.mxu0 0.0
    %377 = vmatpush1.msra.mxu0 %v68
    %378 = vmatprep.subr.mxu0 0.0
    %379 = vmatpush1.msra.mxu0 0.0
    %380 = vmatprep.subr.mxu0 0.0
    %381 = vmatpush1.msra.mxu0 0.0
    %382 = vmatprep.subr.mxu0 0.0
    %383 = vmatpush1.msra.mxu0 0.0
    %384 = vmatprep.subr.mxu0 0.0
    %385 = vmatpush1.msra.mxu0 0.0
    %386 = vmatprep.subr.mxu0 0.0
    %387 = vmatpush1.msra.mxu0 0.0
    %388 = vmatprep.subr.mxu0 0.0
    %389 = vmatpush1.msra.mxu0 0.0
    %390 = vmatprep.subr.mxu0 0.0
    %391 = vmatpush1.msra.mxu0 0.0
    %392 = vmatprep.subr.mxu0 0.0
    %393 = vmatpush1.msra.mxu0 0.0
    %394 = vmatprep.subr.mxu0 0.0
    %395 = vmatpush1.msra.mxu0 0.0
    %396 = vmatprep.subr.mxu0 0.0
    %397 = vmatpush1.msra.mxu0 0.0
    %398 = vmatprep.subr.mxu0 0.0
    %399 = vmatpush1.msra.mxu0 0.0
    %400 = vmatprep.subr.mxu0 0.0
    %401 = vmatpush1.msra.mxu0 0.0
    %402 = vmatprep.subr.mxu0 0.0
    %403 = vmatpush1.msra.mxu0 0.0
    %404 = vmatprep.subr.mxu0 0.0
    %405 = vmatpush1.msra.mxu0 0.0
    %406 = vmatprep.subr.mxu0 0.0
    %407 = vmatpush1.msra.mxu0 0.0
    %408 = vmatprep.subr.mxu0 0.0
    %409 = vmatpush1.msra.mxu0 0.0
    %410 = vmatprep.subr.mxu0 0.0
    %411 = vmatpush1.msra.mxu0 0.0
    %412 = vmatprep.subr.mxu0 0.0
    %413 = vmatpush1.msra.mxu0 0.0
    %414 = vmatprep.subr.mxu0 0.0
    %415 = vmatpush1.msra.mxu0 0.0
    %416 = vmatprep.subr.mxu0 0.0
    %417 = vmatpush1.msra.mxu0 0.0
    %418 = vmatprep.subr.mxu0 0.0
    %419 = vmatpush1.msra.mxu0 0.0
    %420 = vmatprep.subr.mxu0 0.0
    %421 = vmatpush1.msra.mxu0 0.0
    %422 = vmatprep.subr.mxu0 0.0
    %423 = vmatpush1.msra.mxu0 0.0
    %424 = vmatprep.subr.mxu0 0.0
    %425 = vmatpush1.msra.mxu0 0.0
    %426 = vmatprep.subr.mxu0 0.0
    %427 = vmatpush1.msra.mxu0 0.0
    %428 = vmatprep.subr.mxu0 0.0
    %429 = vmatpush1.msra.mxu0 0.0
    %430 = vmatprep.subr.mxu0 0.0
    %431 = vmatpush1.msra.mxu0 0.0
    %432 = vmatprep.subr.mxu0 0.0
    %433 = vmatpush1.msra.mxu0 0.0
    %434 = vmatprep.subr.mxu0 0.0
    %435 = vmatpush1.msra.mxu0 0.0
    %436 = vmatprep.subr.mxu0 0.0
    %437 = vmatpush1.msra.mxu0 0.0
    %438 = vmatprep.mubr.f32.mxu0 0.0
    %439 = vmatmul.mubr.f32.gmra.mrb[0].mxu0 %v89
    %v440 = vpop.f32.mrb[0].mxu0
    %v441 = vadd.f32 0.0, %v440
    %v442 = vpop.f32.mrb[0].mxu0
    %443 = vdwg.mxu0
    %444 = vmatprep.subr.mxu0 0.0
    %445 = vmatpush1.msra.mxu0 %v69
    %446 = vmatprep.subr.mxu0 0.0
    %447 = vmatpush1.msra.mxu0 %v70
    %448 = vmatprep.subr.mxu0 0.0
    %449 = vmatpush1.msra.mxu0 0.0
    %450 = vmatprep.subr.mxu0 0.0
    %451 = vmatpush1.msra.mxu0 0.0
    %452 = vmatprep.subr.mxu0 0.0
    %453 = vmatpush1.msra.mxu0 0.0
    %454 = vmatprep.subr.mxu0 0.0
    %455 = vmatpush1.msra.mxu0 0.0
    %456 = vmatprep.subr.mxu0 0.0
    %457 = vmatpush1.msra.mxu0 0.0
    %458 = vmatprep.subr.mxu0 0.0
    %459 = vmatpush1.msra.mxu0 0.0
    %460 = vmatprep.subr.mxu0 0.0
    %461 = vmatpush1.msra.mxu0 0.0
    %462 = vmatprep.subr.mxu0 0.0
    %463 = vmatpush1.msra.mxu0 0.0
    %464 = vmatprep.subr.mxu0 0.0
    %465 = vmatpush1.msra.mxu0 0.0
    %466 = vmatprep.subr.mxu0 0.0
    %467 = vmatpush1.msra.mxu0 0.0
    %468 = vmatprep.subr.mxu0 0.0
    %469 = vmatpush1.msra.mxu0 0.0
    %470 = vmatprep.subr.mxu0 0.0
    %471 = vmatpush1.msra.mxu0 0.0
    %472 = vmatprep.subr.mxu0 0.0
    %473 = vmatpush1.msra.mxu0 0.0
    %474 = vmatprep.subr.mxu0 0.0
    %475 = vmatpush1.msra.mxu0 0.0
    %476 = vmatprep.subr.mxu0 0.0
    %477 = vmatpush1.msra.mxu0 0.0
    %478 = vmatprep.subr.mxu0 0.0
    %479 = vmatpush1.msra.mxu0 0.0
    %480 = vmatprep.subr.mxu0 0.0
    %481 = vmatpush1.msra.mxu0 0.0
    %482 = vmatprep.subr.mxu0 0.0
    %483 = vmatpush1.msra.mxu0 0.0
    %484 = vmatprep.subr.mxu0 0.0
    %485 = vmatpush1.msra.mxu0 0.0
    %486 = vmatprep.subr.mxu0 0.0
    %487 = vmatpush1.msra.mxu0 0.0
    %488 = vmatprep.subr.mxu0 0.0
    %489 = vmatpush1.msra.mxu0 0.0
    %490 = vmatprep.subr.mxu0 0.0
    %491 = vmatpush1.msra.mxu0 0.0
    %492 = vmatprep.subr.mxu0 0.0
    %493 = vmatpush1.msra.mxu0 0.0
    %494 = vmatprep.subr.mxu0 0.0
    %495 = vmatpush1.msra.mxu0 0.0
    %496 = vmatprep.subr.mxu0 0.0
    %497 = vmatpush1.msra.mxu0 0.0
    %498 = vmatprep.subr.mxu0 0.0
    %499 = vmatpush1.msra.mxu0 0.0
    %500 = vmatprep.subr.mxu0 0.0
    %501 = vmatpush1.msra.mxu0 0.0
    %502 = vmatprep.subr.mxu0 0.0
    %503 = vmatpush1.msra.mxu0 0.0
    %504 = vmatprep.subr.mxu0 0.0
    %505 = vmatpush1.msra.mxu0 0.0
    %506 = vmatprep.subr.mxu0 0.0
    %507 = vmatpush1.msra.mxu0 0.0
    %508 = vmatprep.mubr.f32.mxu0 0.0
    %509 = vmatmul.mubr.f32.gmra.mrb[0].mxu0 %v162
    %v510 = vpop.f32.mrb[0].mxu0
    %v511 = vadd.f32 0.0, %v510
    %v512 = vpop.f32.mrb[0].mxu0
    %513 = vdwg.mxu0
    %vm514 = vcmask 261120
    %v516 = vsel %vm514, %v158, 0
    %v519 = vsel %vm514, %v301, 0
    %521 = vmatprep.subr.mxu0 0.0
    %522 = vmatpush1.xpose.msra.mxu0 %v519
    %523 = vmatprep.subr.mxu0 0.0
    %524 = vmatpush1.xpose.msra.mxu0 0.0
    %525 = vmatprep.subr.mxu0 0.0
    %526 = vmatpush1.xpose.msra.mxu0 0.0
    %527 = vmatprep.subr.mxu0 0.0
    %528 = vmatpush1.xpose.msra.mxu0 0.0
    %529 = vmatprep.subr.mxu0 0.0
    %530 = vmatpush1.xpose.msra.mxu0 0.0
    %531 = vmatprep.subr.mxu0 0.0
    %532 = vmatpush1.xpose.msra.mxu0 0.0
    %533 = vmatprep.subr.mxu0 0.0
    %534 = vmatpush1.xpose.msra.mxu0 0.0
    %535 = vmatprep.subr.mxu0 0.0
    %536 = vmatpush1.xpose.msra.mxu0 0.0
    %537 = vmatprep.subr.mxu0 0.0
    %538 = vmatpush1.xpose.msra.mxu0 0.0
    %539 = vmatprep.subr.mxu0 0.0
    %540 = vmatpush1.xpose.msra.mxu0 0.0
    %541 = vmatprep.subr.mxu0 0.0
    %542 = vmatpush1.xpose.msra.mxu0 0.0
    %543 = vmatprep.subr.mxu0 0.0
    %544 = vmatpush1.xpose.msra.mxu0 0.0
    %545 = vmatprep.subr.mxu0 0.0
    %546 = vmatpush1.xpose.msra.mxu0 0.0
    %547 = vmatprep.subr.mxu0 0.0
    %548 = vmatpush1.xpose.msra.mxu0 0.0
    %549 = vmatprep.subr.mxu0 0.0
    %550 = vmatpush1.xpose.msra.mxu0 0.0
    %551 = vmatprep.subr.mxu0 0.0
    %552 = vmatpush1.xpose.msra.mxu0 0.0
    %553 = vmatprep.subr.mxu0 0.0
    %554 = vmatpush1.xpose.msra.mxu0 0.0
    %555 = vmatprep.subr.mxu0 0.0
    %556 = vmatpush1.xpose.msra.mxu0 0.0
    %557 = vmatprep.subr.mxu0 0.0
    %558 = vmatpush1.xpose.msra.mxu0 0.0
    %559 = vmatprep.subr.mxu0 0.0
    %560 = vmatpush1.xpose.msra.mxu0 0.0
    %561 = vmatprep.subr.mxu0 0.0
    %562 = vmatpush1.xpose.msra.mxu0 0.0
    %563 = vmatprep.subr.mxu0 0.0
    %564 = vmatpush1.xpose.msra.mxu0 0.0
    %565 = vmatprep.subr.mxu0 0.0
    %566 = vmatpush1.xpose.msra.mxu0 0.0
    %567 = vmatprep.subr.mxu0 0.0
    %568 = vmatpush1.xpose.msra.mxu0 0.0
    %569 = vmatprep.subr.mxu0 0.0
    %570 = vmatpush1.xpose.msra.mxu0 0.0
    %571 = vmatprep.subr.mxu0 0.0
    %572 = vmatpush1.xpose.msra.mxu0 0.0
    %573 = vmatprep.subr.mxu0 0.0
    %574 = vmatpush1.xpose.msra.mxu0 0.0
    %575 = vmatprep.subr.mxu0 0.0
    %576 = vmatpush1.xpose.msra.mxu0 0.0
    %577 = vmatprep.subr.mxu0 0.0
    %578 = vmatpush1.xpose.msra.mxu0 0.0
    %579 = vmatprep.subr.mxu0 0.0
    %580 = vmatpush1.xpose.msra.mxu0 0.0
    %581 = vmatprep.subr.mxu0 0.0
    %582 = vmatpush1.xpose.msra.mxu0 0.0
    %583 = vmatprep.subr.mxu0 0.0
    %584 = vmatpush1.xpose.msra.mxu0 0.0
    %585 = vmatprep.mubr.f32.mxu0 0.0
    %586 = vmatmul.mubr.f32.gmra.mrb[0].mxu0 %v516
    %v587 = vpop.f32.mrb[0].mxu0
    %v588 = vadd.f32 0.0, %v587
    %v589 = vpop.f32.mrb[0].mxu0
    %590 = vdwg.mxu0
    %v592 = vsel %vm514, %v231, 0
    %v595 = vsel %vm514, %v371, 0
    %597 = vmatprep.subr.mxu0 0.0
    %598 = vmatpush1.xpose.msra.mxu0 %v595
    %599 = vmatprep.subr.mxu0 0.0
    %600 = vmatpush1.xpose.msra.mxu0 0.0
    %601 = vmatprep.subr.mxu0 0.0
    %602 = vmatpush1.xpose.msra.mxu0 0.0
    %603 = vmatprep.subr.mxu0 0.0
    %604 = vmatpush1.xpose.msra.mxu0 0.0
    %605 = vmatprep.subr.mxu0 0.0
    %606 = vmatpush1.xpose.msra.mxu0 0.0
    %607 = vmatprep.subr.mxu0 0.0
    %608 = vmatpush1.xpose.msra.mxu0 0.0
    %609 = vmatprep.subr.mxu0 0.0
    %610 = vmatpush1.xpose.msra.mxu0 0.0
    %611 = vmatprep.subr.mxu0 0.0
    %612 = vmatpush1.xpose.msra.mxu0 0.0
    %613 = vmatprep.subr.mxu0 0.0
    %614 = vmatpush1.xpose.msra.mxu0 0.0
    %615 = vmatprep.subr.mxu0 0.0
    %616 = vmatpush1.xpose.msra.mxu0 0.0
    %617 = vmatprep.subr.mxu0 0.0
    %618 = vmatpush1.xpose.msra.mxu0 0.0
    %619 = vmatprep.subr.mxu0 0.0
    %620 = vmatpush1.xpose.msra.mxu0 0.0
    %621 = vmatprep.subr.mxu0 0.0
    %622 = vmatpush1.xpose.msra.mxu0 0.0
    %623 = vmatprep.subr.mxu0 0.0
    %624 = vmatpush1.xpose.msra.mxu0 0.0
    %625 = vmatprep.subr.mxu0 0.0
    %626 = vmatpush1.xpose.msra.mxu0 0.0
    %627 = vmatprep.subr.mxu0 0.0
    %628 = vmatpush1.xpose.msra.mxu0 0.0
    %629 = vmatprep.subr.mxu0 0.0
    %630 = vmatpush1.xpose.msra.mxu0 0.0
    %631 = vmatprep.subr.mxu0 0.0
    %632 = vmatpush1.xpose.msra.mxu0 0.0
    %633 = vmatprep.subr.mxu0 0.0
    %634 = vmatpush1.xpose.msra.mxu0 0.0
    %635 = vmatprep.subr.mxu0 0.0
    %636 = vmatpush1.xpose.msra.mxu0 0.0
    %637 = vmatprep.subr.mxu0 0.0
    %638 = vmatpush1.xpose.msra.mxu0 0.0
    %639 = vmatprep.subr.mxu0 0.0
    %640 = vmatpush1.xpose.msra.mxu0 0.0
    %641 = vmatprep.subr.mxu0 0.0
    %642 = vmatpush1.xpose.msra.mxu0 0.0
    %643 = vmatprep.subr.mxu0 0.0
    %644 = vmatpush1.xpose.msra.mxu0 0.0
    %645 = vmatprep.subr.mxu0 0.0
    %646 = vmatpush1.xpose.msra.mxu0 0.0
    %647 = vmatprep.subr.mxu0 0.0
    %648 = vmatpush1.xpose.msra.mxu0 0.0
    %649 = vmatprep.subr.mxu0 0.0
    %650 = vmatpush1.xpose.msra.mxu0 0.0
    %651 = vmatprep.subr.mxu0 0.0
    %652 = vmatpush1.xpose.msra.mxu0 0.0
    %653 = vmatprep.subr.mxu0 0.0
    %654 = vmatpush1.xpose.msra.mxu0 0.0
    %655 = vmatprep.subr.mxu0 0.0
    %656 = vmatpush1.xpose.msra.mxu0 0.0
    %657 = vmatprep.subr.mxu0 0.0
    %658 = vmatpush1.xpose.msra.mxu0 0.0
    %659 = vmatprep.subr.mxu0 0.0
    %660 = vmatpush1.xpose.msra.mxu0 0.0
    %661 = vmatprep.mubr.f32.mxu0 0.0
    %662 = vmatmul.mubr.f32.gmra.mrb[0].mxu0 %v592
    %v663 = vpop.f32.mrb[0].mxu0
    %v664 = vadd.f32 0.0, %v663
    %v665 = vpop.f32.mrb[0].mxu0
    %666 = vdwg.mxu0
    %vm667 = vcmask 64512
    %v668 = vsel %vm667, %v588, -inf
    %669 = vmax.xlane.f32.xlu0 %v668
    %v670 = vpop.xlane.xlu0 %669
    %v671 = vsel %vm667, %v664, -inf
    %672 = vmax.xlane.f32.xlu0 %v671
    %v673 = vpop.xlane.xlu0 %672
    %v674 = vsub.f32 %v588, %v670
    %v675 = vsub.f32 %v664, %v673
    %v676 = vmul.f32 %v674, 1.442695
    %v677 = vpow.pop %v676
    %v678 = vmul.f32 %v675, 1.442695
    %v679 = vpow.pop %v678
    %v681 = vsel %vm667, %v677, 0
    %683 = vmatprep.subr.mxu0 0.0
    %684 = vmatpush1.msra.mxu0 %v441
    %685 = vmatprep.subr.mxu0 0.0
    %686 = vmatpush1.msra.mxu0 0.0
    %687 = vmatprep.subr.mxu0 0.0
    %688 = vmatpush1.msra.mxu0 0.0
    %689 = vmatprep.subr.mxu0 0.0
    %690 = vmatpush1.msra.mxu0 0.0
    %691 = vmatprep.subr.mxu0 0.0
    %692 = vmatpush1.msra.mxu0 0.0
    %693 = vmatprep.subr.mxu0 0.0
    %694 = vmatpush1.msra.mxu0 0.0
    %695 = vmatprep.subr.mxu0 0.0
    %696 = vmatpush1.msra.mxu0 0.0
    %697 = vmatprep.subr.mxu0 0.0
    %698 = vmatpush1.msra.mxu0 0.0
    %699 = vmatprep.subr.mxu0 0.0
    %700 = vmatpush1.msra.mxu0 0.0
    %701 = vmatprep.subr.mxu0 0.0
    %702 = vmatpush1.msra.mxu0 0.0
    %703 = vmatprep.subr.mxu0 0.0
    %704 = vmatpush1.msra.mxu0 0.0
    %705 = vmatprep.subr.mxu0 0.0
    %706 = vmatpush1.msra.mxu0 0.0
    %707 = vmatprep.subr.mxu0 0.0
    %708 = vmatpush1.msra.mxu0 0.0
    %709 = vmatprep.subr.mxu0 0.0
    %710 = vmatpush1.msra.mxu0 0.0
    %711 = vmatprep.subr.mxu0 0.0
    %712 = vmatpush1.msra.mxu0 0.0
    %713 = vmatprep.subr.mxu0 0.0
    %714 = vmatpush1.msra.mxu0 0.0
    %715 = vmatprep.subr.mxu0 0.0
    %716 = vmatpush1.msra.mxu0 0.0
    %717 = vmatprep.subr.mxu0 0.0
    %718 = vmatpush1.msra.mxu0 0.0
    %719 = vmatprep.subr.mxu0 0.0
    %720 = vmatpush1.msra.mxu0 0.0
    %721 = vmatprep.subr.mxu0 0.0
    %722 = vmatpush1.msra.mxu0 0.0
    %723 = vmatprep.subr.mxu0 0.0
    %724 = vmatpush1.msra.mxu0 0.0
    %725 = vmatprep.subr.mxu0 0.0
    %726 = vmatpush1.msra.mxu0 0.0
    %727 = vmatprep.subr.mxu0 0.0
    %728 = vmatpush1.msra.mxu0 0.0
    %729 = vmatprep.subr.mxu0 0.0
    %730 = vmatpush1.msra.mxu0 0.0
    %731 = vmatprep.subr.mxu0 0.0
    %732 = vmatpush1.msra.mxu0 0.0
    %733 = vmatprep.subr.mxu0 0.0
    %734 = vmatpush1.msra.mxu0 0.0
    %735 = vmatprep.subr.mxu0 0.0
    %736 = vmatpush1.msra.mxu0 0.0
    %737 = vmatprep.subr.mxu0 0.0
    %738 = vmatpush1.msra.mxu0 0.0
    %739 = vmatprep.subr.mxu0 0.0
    %740 = vmatpush1.msra.mxu0 0.0
    %741 = vmatprep.subr.mxu0 0.0
    %742 = vmatpush1.msra.mxu0 0.0
    %743 = vmatprep.subr.mxu0 0.0
    %744 = vmatpush1.msra.mxu0 0.0
    %745 = vmatprep.subr.mxu0 0.0
    %746 = vmatpush1.msra.mxu0 0.0
    %747 = vmatprep.mubr.f32.mxu0 0.0
    %748 = vmatmul.mubr.f32.gmra.mrb[0].mxu0 %v681
    %v749 = vpop.f32.mrb[0].mxu0
    %v750 = vadd.f32 0.0, %v749
    %v751 = vpop.f32.mrb[0].mxu0
    %752 = vdwg.mxu0
    %v754 = vsel %vm667, %v679, 0
    %756 = vmatprep.subr.mxu0 0.0
    %757 = vmatpush1.msra.mxu0 %v511
    %758 = vmatprep.subr.mxu0 0.0
    %759 = vmatpush1.msra.mxu0 0.0
    %760 = vmatprep.subr.mxu0 0.0
    %761 = vmatpush1.msra.mxu0 0.0
    %762 = vmatprep.subr.mxu0 0.0
    %763 = vmatpush1.msra.mxu0 0.0
    %764 = vmatprep.subr.mxu0 0.0
    %765 = vmatpush1.msra.mxu0 0.0
    %766 = vmatprep.subr.mxu0 0.0
    %767 = vmatpush1.msra.mxu0 0.0
    %768 = vmatprep.subr.mxu0 0.0
    %769 = vmatpush1.msra.mxu0 0.0
    %770 = vmatprep.subr.mxu0 0.0
    %771 = vmatpush1.msra.mxu0 0.0
    %772 = vmatprep.subr.mxu0 0.0
    %773 = vmatpush1.msra.mxu0 0.0
    %774 = vmatprep.subr.mxu0 0.0
    %775 = vmatpush1.msra.mxu0 0.0
    %776 = vmatprep.subr.mxu0 0.0
    %777 = vmatpush1.msra.mxu0 0.0
    %778 = vmatprep.subr.mxu0 0.0
    %779 = vmatpush1.msra.mxu0 0.0
    %780 = vmatprep.subr.mxu0 0.0
    %781 = vmatpush1.msra.mxu0 0.0
    %782 = vmatprep.subr.mxu0 0.0
    %783 = vmatpush1.msra.mxu0 0.0
    %784 = vmatprep.subr.mxu0 0.0
    %785 = vmatpush1.msra.mxu0 0.0
    %786 = vmatprep.subr.mxu0 0.0
    %787 = vmatpush1.msra.mxu0 0.0
    %788 = vmatprep.subr.mxu0 0.0
    %789 = vmatpush1.msra.mxu0 0.0
    %790 = vmatprep.subr.mxu0 0.0
    %791 = vmatpush1.msra.mxu0 0.0
    %792 = vmatprep.subr.mxu0 0.0
    %793 = vmatpush1.msra.mxu0 0.0
    %794 = vmatprep.subr.mxu0 0.0
    %795 = vmatpush1.msra.mxu0 0.0
    %796 = vmatprep.subr.mxu0 0.0
    %797 = vmatpush1.msra.mxu0 0.0
    %798 = vmatprep.subr.mxu0 0.0
    %799 = vmatpush1.msra.mxu0 0.0
    %800 = vmatprep.subr.mxu0 0.0
    %801 = vmatpush1.msra.mxu0 0.0
    %802 = vmatprep.subr.mxu0 0.0
    %803 = vmatpush1.msra.mxu0 0.0
    %804 = vmatprep.subr.mxu0 0.0
    %805 = vmatpush1.msra.mxu0 0.0
    %806 = vmatprep.subr.mxu0 0.0
    %807 = vmatpush1.msra.mxu0 0.0
    %808 = vmatprep.subr.mxu0 0.0
    %809 = vmatpush1.msra.mxu0 0.0
    %810 = vmatprep.subr.mxu0 0.0
    %811 = vmatpush1.msra.mxu0 0.0
    %812 = vmatprep.subr.mxu0 0.0
    %813 = vmatpush1.msra.mxu0 0.0
    %814 = vmatprep.subr.mxu0 0.0
    %815 = vmatpush1.msra.mxu0 0.0
    %816 = vmatprep.subr.mxu0 0.0
    %817 = vmatpush1.msra.mxu0 0.0
    %818 = vmatprep.subr.mxu0 0.0
    %819 = vmatpush1.msra.mxu0 0.0
    %820 = vmatprep.mubr.f32.mxu0 0.0
    %821 = vmatmul.mubr.f32.gmra.mrb[0].mxu0 %v754
    %v822 = vpop.f32.mrb[0].mxu0
    %v823 = vadd.f32 0.0, %v822
    %v824 = vpop.f32.mrb[0].mxu0
    %825 = vdwg.mxu0
    %v826 = vsel %vm667, %v677, 0.0
    %827 = vadd.xlane.f32.xlu0 %v826
    %v828 = vpop.xlane.xlu0 %827
    %v829 = vsel %vm667, %v679, 0.0
    %830 = vadd.xlane.f32.xlu0 %v829
    %v831 = vpop.xlane.xlu0 %830
    %v832 = vrcp.pop %v828
    %v833 = vmul.f32 %v750, %v832
    %v834 = vrcp.pop %v831
    %v835 = vmul.f32 %v823, %v834
    %v836 = vcombine.high %v833, 0.0
    %v838 = vunpack.c.l.s4 1983009808
    %v839 = vunpack.c.0.s8 %v838
    %v840 = vlaneseq
    %v841 = vshrl.u32 %v840, 7
    %v842 = vsub.s32 %v839, %v841
    %v843 = vrot.slane %v833, %v842
    %v845 = vunpack.c.l.s4 1983009808
    %v846 = vunpack.c.0.s8 %v845
    %v847 = vlaneseq
    %v848 = vshrl.u32 %v847, 7
    %v849 = vsub.s32 %v846, %v848
    %v850 = vrot.slane %v836, %v849
    %v851 = vcombine.high %v835, 0.0
    %v853 = vunpack.c.l.s4 1983009808
    %v854 = vunpack.c.0.s8 %v853
    %v855 = vlaneseq
    %v856 = vshrl.u32 %v855, 7
    %v857 = vsub.s32 %v854, %v856
    %v858 = vrot.slane %v835, %v857
    %v860 = vunpack.c.l.s4 1983009808
    %v861 = vunpack.c.0.s8 %v860
    %v862 = vlaneseq
    %v863 = vshrl.u32 %v862, 7
    %v864 = vsub.s32 %v861, %v863
    %v865 = vrot.slane %v851, %v864
    %v866 = vcombine.low %v843, %v858
    %v867 = vcombine.high %v843, %v858
    %v869 = vunpack.c.l.s4 1934713408
    %v870 = vunpack.c.0.s8 %v869
    %v871 = vlaneseq
    %v872 = vshrl.u32 %v871, 7
    %v873 = vsub.s32 %v870, %v872
    %v874 = vrot.slane %v866, %v873
    %v876 = vunpack.c.l.s4 1934713408
    %v877 = vunpack.c.0.s8 %v876
    %v878 = vlaneseq
    %v879 = vshrl.u32 %v878, 7
    %v880 = vsub.s32 %v877, %v879
    %v881 = vrot.slane %v867, %v880
    %v882 = vcombine.low %v850, %v865
    %v883 = vcombine.high %v850, %v865
    %v885 = vunpack.c.l.s4 1934713408
    %v886 = vunpack.c.0.s8 %v885
    %v887 = vlaneseq
    %v888 = vshrl.u32 %v887, 7
    %v889 = vsub.s32 %v886, %v888
    %v890 = vrot.slane %v882, %v889
    %v892 = vunpack.c.l.s4 1934713408
    %v893 = vunpack.c.0.s8 %v892
    %v894 = vlaneseq
    %v895 = vshrl.u32 %v894, 7
    %v896 = vsub.s32 %v893, %v895
    %v897 = vrot.slane %v883, %v896
    %v898 = vcombine.high %v874, 0.0
    %v899 = vcombine.high %v881, 0.0
    %v900 = vcombine.high %v890, 0.0
    %v901 = vcombine.high %v897, 0.0
    %903 = vrot.lane.b32.xlu0 %v898, 32
    %v904 = vpop.permute.xlu0 %903
    %907 = vrot.lane.b32.xlu0 %v881, 64
    %v908 = vpop.permute.xlu0 %907
    %911 = vrot.lane.b32.xlu0 %v899, 96
    %v912 = vpop.permute.xlu0 %911
    %915 = vrot.lane.b32.xlu0 %v900, 32
    %v916 = vpop.permute.xlu0 %915
    %919 = vrot.lane.b32.xlu0 %v897, 64
    %v920 = vpop.permute.xlu0 %919
    %923 = vrot.lane.b32.xlu0 %v901, 96
    %v924 = vpop.permute.xlu0 %923
    %v926 = vsel %vm514, %v874, %v904
    %vm927 = vcmask 523264
    %v928 = vsel %vm927, %v926, %v908
    %vm929 = vcmask 785408
    %v930 = vsel %vm929, %v928, %v912
    %v931 = vsel %vm514, %v890, %v916
    %v932 = vsel %vm927, %v931, %v920
    %v933 = vsel %vm929, %v932, %v924
    %v936 = vcombine.low %v930, %v933
    %v938 = vunpack.c.l.s4 1983009808
    %v939 = vunpack.c.0.s8 %v938
    %v940 = vlaneseq
    %v941 = vshrl.u32 %v940, 7
    %v942 = vsub.s32 %v939, %v941
    %v943 = vrot.slane %v936, %v942
    %945 = vst [vmem:[#allocation7] sm:$0xf] %v943
    // Predicated region
    $region30: #{tpu_custom_call.1} parent=1 // pred_check
      _
    $region31: #{tpu_custom_call.1} parent=1 // pred_check_branch
      %947 = sbr.rel (0) target = $region33
    $region32: #{tpu_custom_call.1} parent=1 // pred_region
      %s949 = ssub.s32 64, 64
      %950 = vsyncadd [#allocation4], %s949
      %s952 = sshll.u32 [#allocation7], 4
      %s953 = int_to_ptr.vmem [resolvable:$true] %s952
      %955 = dma.vmem_to_hbm [thread:$0]  %s953, 64, %s5, [#allocation4]
    $region33: #{tpu_custom_call.1} parent=1 // pred_fallthru
      _
    // Predicated region
    $region34: #{tpu_custom_call.1} parent=1 // pred_check
      _
    $region35: #{tpu_custom_call.1} parent=1 // pred_check_branch
      %957 = sbr.rel (0) target = $region37
    $region36: #{tpu_custom_call.1} parent=1 // pred_region
      %958 = dma.done [#allocation4], 64
    $region37: #{tpu_custom_call.1} parent=1 // pred_fallthru
      _
    %959 = vsyncpa [#allocation3], 1
    %960 = vsyncpa [#allocation6], 1
    %961 = vsyncpa [#allocation4], 1

</llo_original>
